<compile_context>
chip_gen: v7x
topology: tpu7x:2x2x1
jax: 0.10.0
libtpu: 0.0.40
codegen_flags: <defaults>
</compile_context>

<pallas_src>
import functools

import jax
import jax.numpy as jnp
from jax.experimental import pallas as pl
from jax.experimental.pallas import tpu as pltpu


def _vmem_limit_bytes():
    """Generation-dependent scoped-VMEM budget: ~half of physical VMEM,
    clamped to [32 MiB, 64 MiB] (64 MiB on 128 MiB v5e/v6e, 32 MiB on 64 MiB
    v7x).  Falls back to the always-safe 32 MiB if the query is unavailable."""
    cap = None
    try:
        info = pltpu.get_tpu_info()
        cap = getattr(info, "vmem_capacity_bytes", None)
    except Exception:
        cap = None
    if not cap:
        return 32 * 1024 * 1024
    return int(min(max(cap // 2, 32 * 1024 * 1024), 64 * 1024 * 1024))


def _num_parallel_cores():
    """TensorCores to spread kernel 1's parallel grid axis over.  Defaults to 2,
    which is correct (just serial) on 1-TC chips and uses both TCs on v7x."""
    try:
        info = pltpu.get_tpu_info()
        for attr in ("num_cores", "core_count", "num_tensorcores"):
            v = getattr(info, attr, None)
            if isinstance(v, int) and v > 0:
                return min(v, 8)
    except Exception:
        pass
    return 2


def _pick_tile(m, target):
    """Small M: one block covering the whole array (block dim == full dim is
    always layout-legal).  Large M: the target tile (a multiple of 128, so the
    lane-dense kernel-2 output block uses unmasked full-width stores)."""
    return m if m <= target else target


# -----------------------------------------------------------------------------
# Kernel 1: deconv1 per-pixel matmul + bias, fused with BN sum / sum-of-squares
#           grid = (cores, steps); per-core partial statistics.
# -----------------------------------------------------------------------------
def _deconv1_stats_kernel(x_ref, w_ref, b_ref, y_ref, sum_ref, sq_ref,
                          *, m_total, tm, steps, exact):
    s_id = pl.program_id(1)

    @pl.when(s_id == 0)
    def _():
        sum_ref[...] = jnp.zeros_like(sum_ref)
        sq_ref[...] = jnp.zeros_like(sq_ref)

    y = jnp.dot(x_ref[...], w_ref[...], preferred_element_type=jnp.float32)
    y = y + b_ref[...].astype(jnp.float32)

    if exact:
        # Grid tiles the rows exactly: no masking ever needed.
        sum_ref[...] += jnp.sum(y, axis=0, keepdims=True)
        sq_ref[...] += jnp.sum(y * y, axis=0, keepdims=True)
    else:
        # bi is the UNCLAMPED logical row-block index; duplicate blocks
        # (bi >= total_blocks, clamped in the index_map) and the partial tail
        # block are masked out of the statistics.  Interior steps take the
        # cheap unmasked path.
        bi = pl.program_id(0) * steps + s_id
        block_end = (bi + 1) * tm

        @pl.when(block_end <= m_total)
        def _():
            sum_ref[...] += jnp.sum(y, axis=0, keepdims=True)
            sq_ref[...] += jnp.sum(y * y, axis=0, keepdims=True)

        @pl.when(block_end > m_total)
        def _():
            row = bi * tm + jax.lax.broadcasted_iota(jnp.int32, (tm, 1), 0)
            yv = jnp.where(row < m_total, y, 0.0)
            sum_ref[...] += jnp.sum(yv, axis=0, keepdims=True)
            sq_ref[...] += jnp.sum(yv * yv, axis=0, keepdims=True)

    y_ref[...] = y.astype(y_ref.dtype)


def deconv1_stats(x, w, b, *, out_dtype=jnp.float32, tm=2048):
    M, K = x.shape
    _, N = w.shape
    tm = _pick_tile(M, tm)
    total_blocks = pl.cdiv(M, tm)

    p = min(_num_parallel_cores(), total_blocks)
    steps = pl.cdiv(total_blocks, p)
    p = pl.cdiv(total_blocks, steps)          # drop cores that would be empty
    exact = (p * steps == total_blocks) and (total_blocks * tm == M)

    if p * steps == total_blocks:
        def row_block(c, s):
            return (c * steps + s, 0)
    else:
        # Clamp duplicate trailing blocks onto the last real block so every
        # grid point reads/writes in-bounds data (their stats are masked).
        def row_block(c, s):
            return (jnp.minimum(c * steps + s, total_blocks - 1), 0)

    kernel = functools.partial(_deconv1_stats_kernel, m_total=M, tm=tm,
                               steps=steps, exact=exact)

    y1, psum, psq = pl.pallas_call(
        kernel,
        out_shape=(jax.ShapeDtypeStruct((M, N), out_dtype),
                   jax.ShapeDtypeStruct((p, 1, N), jnp.float32),
                   jax.ShapeDtypeStruct((p, 1, N), jnp.float32)),
        grid_spec=pltpu.PrefetchScalarGridSpec(
            num_scalar_prefetch=0,
            grid=(p, steps),
            in_specs=[
                pl.BlockSpec((tm, K), row_block),
                pl.BlockSpec((K, N), lambda c, s: (0, 0)),
                pl.BlockSpec((1, N), lambda c, s: (0, 0)),
            ],
            out_specs=[
                pl.BlockSpec((tm, N), row_block),
                # per-core partial accumulators, revisited only along the
                # "arbitrary" axis (no sharing across the parallel axis)
                pl.BlockSpec((None, 1, N), lambda c, s: (c, 0, 0)),
                pl.BlockSpec((None, 1, N), lambda c, s: (c, 0, 0)),
            ],
        ),
        compiler_params=pltpu.CompilerParams(
            dimension_semantics=("parallel", "arbitrary"),
            vmem_limit_bytes=_vmem_limit_bytes(),
        ),
    )(x, w, b)
    # tiny cross-core reduction of the partials
    return y1, psum.sum(axis=(0, 1)), psq.sum(axis=(0, 1))


# -----------------------------------------------------------------------------
# Kernel 2: (BN-folded) deconv2 per-pixel matmul + bias + sigmoid,
#           LANE-DENSE transposed output (4*C2, rows).
# -----------------------------------------------------------------------------
def _deconv2_sigmoid_kernel(x_ref, w_ref, b_ref, o_ref):
    # (x @ w)^T computed directly so the output block is (4*C2, tm):
    # tm lanes wide -> full unmasked vector stores instead of 12-lane vst.msk.
    yt = jax.lax.dot_general(
        w_ref[...], x_ref[...],
        dimension_numbers=(((0,), (1,)), ((), ())),
        preferred_element_type=jnp.float32)
    o_ref[...] = jax.nn.sigmoid(yt + b_ref[...].astype(jnp.float32)).astype(o_ref.dtype)


def deconv2_sigmoid(x, w, b, *, tm=2048):
    M, K = x.shape
    _, N = w.shape                       # N = 4*C2
    tm = _pick_tile(M, tm)
    grid = pl.cdiv(M, tm)
    # TODO(synk): if DMA is still exposed at production shapes, add
    #             pipeline_mode=pl.Buffered(3) to the activation in_spec.
    return pl.pallas_call(
        _deconv2_sigmoid_kernel,
        out_shape=jax.ShapeDtypeStruct((N, M), jnp.float32),
        grid_spec=pltpu.PrefetchScalarGridSpec(
            num_scalar_prefetch=0,
            grid=(grid,),
            in_specs=[
                pl.BlockSpec((tm, K), lambda i: (i, 0)),
                pl.BlockSpec((K, N), lambda i: (0, 0)),
                pl.BlockSpec((N, 1), lambda i: (0, 0)),
            ],
            out_specs=pl.BlockSpec((N, tm), lambda i: (0, i)),
        ),
        compiler_params=pltpu.CompilerParams(
            dimension_semantics=("parallel",),
            vmem_limit_bytes=_vmem_limit_bytes(),
        ),
    )(x, w, b)


# -----------------------------------------------------------------------------
# Glue: parameter flattening + forward pass
# -----------------------------------------------------------------------------
def _flatten_deconv_weight(w):
    """PyTorch ConvTranspose2d weight (C_in, C_out, 2, 2) -> (C_in, 4*C_out)
    with output-column layout (ki, kj, c_out)."""
    c_in, c_out, kh, kw = w.shape
    return jnp.transpose(w, (0, 2, 3, 1)).reshape(c_in, kh * kw * c_out)


def deconv2net_forward(x_nchw, params, eps=1e-5, *, tm1=2048, tm2=2048,
                       use_bf16=False):
    n, c0, h, w = x_nchw.shape
    c1 = params["w1"].shape[1]
    c2 = params["w2"].shape[1]
    store_dtype = jnp.bfloat16 if use_bf16 else jnp.float32

    # --- deconv1 + fused BN statistics (one HBM pass over y1) ---
    x = jnp.transpose(x_nchw, (0, 2, 3, 1)).reshape(n * h * w, c0)   # NHWC flat
    w1_flat = _flatten_deconv_weight(params["w1"])                   # (C0, 4*C1)
    b1_flat = jnp.tile(params["b1"], 4).reshape(1, 4 * c1)           # (1, 4*C1)
    if use_bf16:
        x = x.astype(jnp.bfloat16)
        w1_flat = w1_flat.astype(jnp.bfloat16)

    y1, s, sq = deconv1_stats(x, w1_flat, b1_flat,
                              out_dtype=store_dtype, tm=tm1)         # Pallas

    # --- BN batch statistics: fold the 4 (ki,kj) column groups per channel ---
    count = 4 * n * h * w                                            # N*2H*2W
    # TODO(synk): single-pass E[x^2]-E[x]^2 in f32 can cancel at very large
    #             N*H*W; guarded with max(.,0), fine at these sizes.
    mean = s.reshape(4, c1).sum(0) / count
    var = jnp.maximum(sq.reshape(4, c1).sum(0) / count - mean * mean, 0.0)
    inv_std = jax.lax.rsqrt(var + eps)
    scale = params["gamma"] * inv_std
    shift = params["beta"] - mean * scale

    # --- fold BN affine into deconv2 weights (tiny K*N op) ---
    w2_flat = _flatten_deconv_weight(params["w2"])                   # (C1, 4*C2)
    b2_flat = jnp.tile(params["b2"], 4)                              # (4*C2,)
    w2_fold = scale[:, None] * w2_flat
    b2_fold = (shift @ w2_flat + b2_flat).reshape(4 * c2, 1)
    if use_bf16:
        w2_fold = w2_fold.astype(jnp.bfloat16)

    # --- deconv2 + sigmoid: no intermediate scatter needed ---
    # (M, 4*C1) row-major IS (4*M, C1) with rows ordered (n, h, w, ki, kj),
    # i.e. exactly the per-upsampled-pixel rows deconv2 consumes: free reshape.
    y1_rows = y1.reshape(4 * n * h * w, c1)
    y2t = deconv2_sigmoid(y1_rows, w2_fold, b2_fold, tm=tm2)         # Pallas
    # y2t: rows (ki2, kj2, c2), cols (n, h, w, ki, kj)  [lane-dense]

    # --- single final regroup to NCHW (module semantics require NCHW; emit
    #     NHWC directly here instead if the consumer allows it) ---
    y2t = y2t.reshape(2, 2, c2, n, h, w, 2, 2)
    out = jnp.transpose(y2t, (3, 2, 4, 6, 0, 5, 7, 1))
    return out.reshape(n, c2, 4 * h, 4 * w)


# -----------------------------------------------------------------------------
# Pure-JAX reference (independent formulation) for a correctness check
# -----------------------------------------------------------------------------
def _ref_forward(x_nchw, params, eps=1e-5):
    hp = jax.lax.Precision.HIGHEST

    def deconv(x, w, b):                        # x NCHW, w (Cin, Cout, 2, 2)
        y = jnp.einsum("nihw,iokl->nohkwl", x, w, precision=hp)
        n, co, hh, _, ww, _ = y.shape
        return y.reshape(n, co, 2 * hh, 2 * ww) + b[None, :, None, None]

    y = deconv(x_nchw, params["w1"], params["b1"])
    mean = y.mean(axis=(0, 2, 3), keepdims=True)
    var = y.var(axis=(0, 2, 3), keepdims=True)          # biased, training-mode
    yn = (y - mean) * jax.lax.rsqrt(var + eps)
    yn = yn * params["gamma"][None, :, None, None] + params["beta"][None, :, None, None]
    z = deconv(yn, params["w2"], params["b2"])
    return jax.nn.sigmoid(z)


# -----------------------------------------------------------------------------
# Deterministic parameter init + run
# -----------------------------------------------------------------------------
def init_params(key, channels=(32, 16, 3)):
    c0, c1, c2 = channels
    k = jax.random.split(key, 6)
    # ConvTranspose2d weight shape: (in_channels, out_channels, kH, kW)
    return {
        "w1": 0.1 * jax.random.normal(k[0], (c0, c1, 2, 2), jnp.float32),
        "b1": 0.1 * jax.random.normal(k[1], (c1,), jnp.float32),
        "gamma": 1.0 + 0.1 * jax.random.normal(k[2], (c1,), jnp.float32),
        "beta": 0.1 * jax.random.normal(k[3], (c1,), jnp.float32),
        "w2": 0.1 * jax.random.normal(k[4], (c1, c2, 2, 2), jnp.float32),
        "b2": 0.1 * jax.random.normal(k[5], (c2,), jnp.float32),
    }


if __name__ == "__main__":
    key = jax.random.PRNGKey(0)
    k_x, k_p = jax.random.split(key)

    channels = (32, 16, 3)          # scaled-down (256, 128, 3)
    N, H, W = 2, 8, 8
    x = jax.random.normal(k_x, (N, channels[0], H, W), jnp.float32)
    params = init_params(k_p, channels)

    # --- test 1: f32 path, single-block tiling ---
    out = jax.block_until_ready(jax.jit(deconv2net_forward)(x, params))
    assert out.shape == (N, channels[-1], 4 * H, 4 * W), out.shape
    assert bool(jnp.all(jnp.isfinite(out)))
    assert bool(jnp.all((out >= 0.0) & (out <= 1.0)))   # sigmoid range
    ref = _ref_forward(x, params)
    max_err = float(jnp.max(jnp.abs(out - ref)))
    assert max_err < 5e-3, f"max abs error vs reference (f32): {max_err}"

    # --- test 2: force multi-block grid, core split, tail/duplicate masking ---
    H2, W2 = 8, 10                                      # 160 rows, odd tiling
    x2 = jax.random.normal(jax.random.PRNGKey(1), (N, channels[0], H2, W2),
                           jnp.float32)
    fwd2 = jax.jit(functools.partial(deconv2net_forward, tm1=64, tm2=256))
    out2 = jax.block_until_ready(fwd2(x2, params))
    ref2 = _ref_forward(x2, params)
    max_err2 = float(jnp.max(jnp.abs(out2 - ref2)))
    assert max_err2 < 5e-3, f"max abs error vs reference (tiled): {max_err2}"

    # --- test 3: bf16 storage path (production config), loose tolerance ---
    fwd_bf16 = jax.jit(functools.partial(deconv2net_forward, use_bf16=True))
    out_b = jax.block_until_ready(fwd_bf16(x, params))
    assert bool(jnp.all(jnp.isfinite(out_b)))
    assert bool(jnp.all((out_b >= 0.0) & (out_b <= 1.0)))
    assert float(jnp.max(jnp.abs(out_b - ref))) < 1e-1

    print("KERNEL_OK")
</pallas_src>

<mosaic_0001>
module attributes {stable_mosaic.version = 11 : i64} {
  func.func @_deconv1_stats_kernel(%arg0: i32, %arg1: i32, %arg2: memref<128x32xf32, #tpu.memory_space<vmem>>, %arg3: memref<32x64xf32, #tpu.memory_space<vmem>>, %arg4: memref<1x64xf32, #tpu.memory_space<vmem>>, %arg5: memref<128x64xf32, #tpu.memory_space<vmem>>, %arg6: memref<1x1x64xf32, #tpu.memory_space<vmem>>, %arg7: memref<1x1x64xf32, #tpu.memory_space<vmem>>) attributes {dimension_semantics = [#tpu.dimension_semantics<parallel>, #tpu.dimension_semantics<arbitrary>], iteration_bounds = array<i64: 1, 1>, scalar_prefetch = 0 : i64, scratch_operands = 0 : i64, tpu.core_type = #tpu.core_type<tc>, window_params = [{transform_indices = @transform_0, window_bounds = array<i64: 128, 32>}, {pipeline_mode = #tpu.pipeline_mode<synchronous>, transform_indices = @transform_1, window_bounds = array<i64: 32, 64>}, {pipeline_mode = #tpu.pipeline_mode<synchronous>, transform_indices = @transform_2, window_bounds = array<i64: 1, 64>}, {transform_indices = @transform_3, window_bounds = array<i64: 128, 64>}, {transform_indices = @transform_4, window_bounds = array<i64: 1, 1, 64>}, {transform_indices = @transform_5, window_bounds = array<i64: 1, 1, 64>}]} {
    %c0_i32 = arith.constant 0 : i32
    %0 = arith.cmpi eq, %arg1, %c0_i32 : i32
    %1 = arith.extui %0 : i1 to i32
    %c0_i32_0 = arith.constant 0 : i32
    %2 = arith.cmpi ne, %1, %c0_i32_0 : i32
    scf.if %2 {
      %cst_22 = arith.constant 0.000000e+00 : f32
      %27 = vector.broadcast %cst_22 : f32 to vector<1x64xf32>
      %c0_23 = arith.constant 0 : index
      %c0_24 = arith.constant 0 : index
      %c0_25 = arith.constant 0 : index
      %28 = vector.load %arg6[%c0_23, %c0_24, %c0_25] : memref<1x1x64xf32, #tpu.memory_space<vmem>>, vector<1x1x64xf32>
      %29 = vector.shape_cast %28 : vector<1x1x64xf32> to vector<1x64xf32>
      %30 = vector.shape_cast %27 : vector<1x64xf32> to vector<1x1x64xf32>
      tpu.vector_store %arg6[%c0_23, %c0_24, %c0_25], %30 {strides = array<i32>} : memref<1x1x64xf32, #tpu.memory_space<vmem>>, vector<1x1x64xf32>,
      %cst_26 = arith.constant 0.000000e+00 : f32
      %31 = vector.broadcast %cst_26 : f32 to vector<1x64xf32>
      %c0_27 = arith.constant 0 : index
      %c0_28 = arith.constant 0 : index
      %c0_29 = arith.constant 0 : index
      %32 = vector.load %arg7[%c0_27, %c0_28, %c0_29] : memref<1x1x64xf32, #tpu.memory_space<vmem>>, vector<1x1x64xf32>
      %33 = vector.shape_cast %32 : vector<1x1x64xf32> to vector<1x64xf32>
      %34 = vector.shape_cast %31 : vector<1x64xf32> to vector<1x1x64xf32>
      tpu.vector_store %arg7[%c0_27, %c0_28, %c0_29], %34 {strides = array<i32>} : memref<1x1x64xf32, #tpu.memory_space<vmem>>, vector<1x1x64xf32>,
    } else {
    }
    %c0 = arith.constant 0 : index
    %c0_1 = arith.constant 0 : index
    %3 = vector.load %arg2[%c0, %c0_1] : memref<128x32xf32, #tpu.memory_space<vmem>>, vector<128x32xf32>
    %c0_2 = arith.constant 0 : index
    %c0_3 = arith.constant 0 : index
    %4 = vector.load %arg3[%c0_2, %c0_3] : memref<32x64xf32, #tpu.memory_space<vmem>>, vector<32x64xf32>
    %cst = arith.constant dense<0.000000e+00> : vector<128x64xf32>
    %5 = tpu.matmul %3, %4, %cst {dimension_numbers = #tpu.dot_dimension_numbers<[1], [0], [0], [1], [0, 0, 1, 1], [], []>} : vector<128x32xf32>, vector<32x64xf32>, vector<128x64xf32> -> vector<128x64xf32>
    %c0_4 = arith.constant 0 : index
    %c0_5 = arith.constant 0 : index
    %6 = vector.load %arg4[%c0_4, %c0_5] : memref<1x64xf32, #tpu.memory_space<vmem>>, vector<1x64xf32>
    %7 = vector.broadcast %6 : vector<1x64xf32> to vector<128x64xf32>
    %8 = arith.addf %5, %7 : vector<128x64xf32>
    %c0_6 = arith.constant 0 : index
    %c0_7 = arith.constant 0 : index
    %c0_8 = arith.constant 0 : index
    %9 = vector.load %arg6[%c0_6, %c0_7, %c0_8] : memref<1x1x64xf32, #tpu.memory_space<vmem>>, vector<1x1x64xf32>
    %10 = vector.shape_cast %9 : vector<1x1x64xf32> to vector<1x64xf32>
    %cst_9 = arith.constant dense<0.000000e+00> : vector<64xf32>
    %11 = vector.multi_reduction <add>, %8, %cst_9 [0] : vector<128x64xf32> to vector<64xf32>
    %12 = vector.shape_cast %11 : vector<64xf32> to vector<1x64xf32>
    %13 = arith.addf %10, %12 : vector<1x64xf32>
    %c0_10 = arith.constant 0 : index
    %c0_11 = arith.constant 0 : index
    %c0_12 = arith.constant 0 : index
    %14 = vector.load %arg6[%c0_10, %c0_11, %c0_12] : memref<1x1x64xf32, #tpu.memory_space<vmem>>, vector<1x1x64xf32>
    %15 = vector.shape_cast %14 : vector<1x1x64xf32> to vector<1x64xf32>
    %16 = vector.shape_cast %13 : vector<1x64xf32> to vector<1x1x64xf32>
    tpu.vector_store %arg6[%c0_10, %c0_11, %c0_12], %16 {strides = array<i32>} : memref<1x1x64xf32, #tpu.memory_space<vmem>>, vector<1x1x64xf32>,
    %c0_13 = arith.constant 0 : index
    %c0_14 = arith.constant 0 : index
    %c0_15 = arith.constant 0 : index
    %17 = vector.load %arg7[%c0_13, %c0_14, %c0_15] : memref<1x1x64xf32, #tpu.memory_space<vmem>>, vector<1x1x64xf32>
    %18 = vector.shape_cast %17 : vector<1x1x64xf32> to vector<1x64xf32>
    %19 = arith.mulf %8, %8 : vector<128x64xf32>
    %cst_16 = arith.constant dense<0.000000e+00> : vector<64xf32>
    %20 = vector.multi_reduction <add>, %19, %cst_16 [0] : vector<128x64xf32> to vector<64xf32>
    %21 = vector.shape_cast %20 : vector<64xf32> to vector<1x64xf32>
    %22 = arith.addf %18, %21 : vector<1x64xf32>
    %c0_17 = arith.constant 0 : index
    %c0_18 = arith.constant 0 : index
    %c0_19 = arith.constant 0 : index
    %23 = vector.load %arg7[%c0_17, %c0_18, %c0_19] : memref<1x1x64xf32, #tpu.memory_space<vmem>>, vector<1x1x64xf32>
    %24 = vector.shape_cast %23 : vector<1x1x64xf32> to vector<1x64xf32>
    %25 = vector.shape_cast %22 : vector<1x64xf32> to vector<1x1x64xf32>
    tpu.vector_store %arg7[%c0_17, %c0_18, %c0_19], %25 {strides = array<i32>} : memref<1x1x64xf32, #tpu.memory_space<vmem>>, vector<1x1x64xf32>,
    %c0_20 = arith.constant 0 : index
    %c0_21 = arith.constant 0 : index
    %26 = vector.load %arg5[%c0_20, %c0_21] : memref<128x64xf32, #tpu.memory_space<vmem>>, vector<128x64xf32>
    tpu.vector_store %arg5[%c0_20, %c0_21], %8 {strides = array<i32>} : memref<128x64xf32, #tpu.memory_space<vmem>>, vector<128x64xf32>,
    return
  }
  func.func @transform_0(%arg0: i32, %arg1: i32) -> (i32, i32) {
    %c1_i32 = arith.constant 1 : i32
    %0 = arith.muli %arg0, %c1_i32 : i32
    %1 = arith.addi %0, %arg1 : i32
    %c0_i32 = arith.constant 0 : i32
    %c0_i32_0 = arith.constant 0 : i32
    return %1, %c0_i32 : i32, i32
  }
  func.func @transform_1(%arg0: i32, %arg1: i32) -> (i32, i32) {
    %c0_i32 = arith.constant 0 : i32
    %c0_i32_0 = arith.constant 0 : i32
    %c0_i32_1 = arith.constant 0 : i32
    return %c0_i32, %c0_i32_0 : i32, i32
  }
  func.func @transform_2(%arg0: i32, %arg1: i32) -> (i32, i32) {
    %c0_i32 = arith.constant 0 : i32
    %c0_i32_0 = arith.constant 0 : i32
    %c0_i32_1 = arith.constant 0 : i32
    return %c0_i32, %c0_i32_0 : i32, i32
  }
  func.func @transform_3(%arg0: i32, %arg1: i32) -> (i32, i32) {
    %c1_i32 = arith.constant 1 : i32
    %0 = arith.muli %arg0, %c1_i32 : i32
    %1 = arith.addi %0, %arg1 : i32
    %c0_i32 = arith.constant 0 : i32
    %c0_i32_0 = arith.constant 0 : i32
    return %1, %c0_i32 : i32, i32
  }
  func.func @transform_4(%arg0: i32, %arg1: i32) -> (i32, i32, i32) {
    %c0_i32 = arith.constant 0 : i32
    %c0_i32_0 = arith.constant 0 : i32
    %c0_i32_1 = arith.constant 0 : i32
    return %arg0, %c0_i32, %c0_i32_0 : i32, i32, i32
  }
  func.func @transform_5(%arg0: i32, %arg1: i32) -> (i32, i32, i32) {
    %c0_i32 = arith.constant 0 : i32
    %c0_i32_0 = arith.constant 0 : i32
    %c0_i32_1 = arith.constant 0 : i32
    return %arg0, %c0_i32, %c0_i32_0 : i32, i32, i32
  }
}

module attributes {stable_mosaic.version = 11 : i64} {
  func.func @_deconv2_sigmoid_kernel(%arg0: i32, %arg1: memref<512x16xf32, #tpu.memory_space<vmem>>, %arg2: memref<16x12xf32, #tpu.memory_space<vmem>>, %arg3: memref<12x1xf32, #tpu.memory_space<vmem>>, %arg4: memref<12x512xf32, #tpu.memory_space<vmem>>) attributes {dimension_semantics = [#tpu.dimension_semantics<parallel>], iteration_bounds = array<i64: 1>, scalar_prefetch = 0 : i64, scratch_operands = 0 : i64, tpu.core_type = #tpu.core_type<tc>, window_params = [{transform_indices = @transform_0, window_bounds = array<i64: 512, 16>}, {pipeline_mode = #tpu.pipeline_mode<synchronous>, transform_indices = @transform_1, window_bounds = array<i64: 16, 12>}, {pipeline_mode = #tpu.pipeline_mode<synchronous>, transform_indices = @transform_2, window_bounds = array<i64: 12, 1>}, {transform_indices = @transform_3, window_bounds = array<i64: 12, 512>}]} {
    %c0 = arith.constant 0 : index
    %c0_0 = arith.constant 0 : index
    %0 = vector.load %arg2[%c0, %c0_0] : memref<16x12xf32, #tpu.memory_space<vmem>>, vector<16x12xf32>
    %c0_1 = arith.constant 0 : index
    %c0_2 = arith.constant 0 : index
    %1 = vector.load %arg1[%c0_1, %c0_2] : memref<512x16xf32, #tpu.memory_space<vmem>>, vector<512x16xf32>
    %cst = arith.constant dense<0.000000e+00> : vector<12x512xf32>
    %2 = tpu.matmul %0, %1, %cst {dimension_numbers = #tpu.dot_dimension_numbers<[0], [1], [1], [0], [0, 1, 1, 0], [], []>} : vector<16x12xf32>, vector<512x16xf32>, vector<12x512xf32> -> vector<12x512xf32>
    %c0_3 = arith.constant 0 : index
    %c0_4 = arith.constant 0 : index
    %3 = vector.load %arg3[%c0_3, %c0_4] : memref<12x1xf32, #tpu.memory_space<vmem>>, vector<12x1xf32>
    %4 = vector.broadcast %3 : vector<12x1xf32> to vector<12x512xf32>
    %5 = arith.addf %2, %4 : vector<12x512xf32>
    %6 = arith.negf %5 : vector<12x512xf32>
    %7 = math.exp %6 : vector<12x512xf32>
    %cst_5 = arith.constant 1.000000e+00 : f32
    %8 = vector.broadcast %cst_5 : f32 to vector<12x512xf32>
    %9 = arith.addf %8, %7 : vector<12x512xf32>
    %10 = arith.divf %8, %9 : vector<12x512xf32>
    %c0_6 = arith.constant 0 : index
    %c0_7 = arith.constant 0 : index
    %11 = vector.load %arg4[%c0_6, %c0_7] : memref<12x512xf32, #tpu.memory_space<vmem>>, vector<12x512xf32>
    tpu.vector_store %arg4[%c0_6, %c0_7], %10 {strides = array<i32>} : memref<12x512xf32, #tpu.memory_space<vmem>>, vector<12x512xf32>,
    return
  }
  func.func @transform_0(%arg0: i32) -> (i32, i32) {
    %c0_i32 = arith.constant 0 : i32
    %c0_i32_0 = arith.constant 0 : i32
    return %arg0, %c0_i32 : i32, i32
  }
  func.func @transform_1(%arg0: i32) -> (i32, i32) {
    %c0_i32 = arith.constant 0 : i32
    %c0_i32_0 = arith.constant 0 : i32
    %c0_i32_1 = arith.constant 0 : i32
    return %c0_i32, %c0_i32_0 : i32, i32
  }
  func.func @transform_2(%arg0: i32) -> (i32, i32) {
    %c0_i32 = arith.constant 0 : i32
    %c0_i32_0 = arith.constant 0 : i32
    %c0_i32_1 = arith.constant 0 : i32
    return %c0_i32, %c0_i32_0 : i32, i32
  }
  func.func @transform_3(%arg0: i32) -> (i32, i32) {
    %c0_i32 = arith.constant 0 : i32
    %c0_i32_0 = arith.constant 0 : i32
    return %c0_i32, %arg0 : i32, i32
  }
}

</mosaic_0001>

<llo_original>
// kernel: tile.14
$region0: #{tile.14}
  %s0 = inlined_call_operand.vmem [shape: f32[4,16], index: 0, kind: input, shape index: {}]
  %s1 = inlined_call_operand.vmem [shape: f32[1,64], index: 1, kind: output, shape index: {}]
  $region1: #{tile.14} parent=0
    #allocation0 [shape = 'u8[4096]{0}', space=vmem, size = 0x1000, scoped, tag = 'scoped mem for output reshape']
    #allocation1 [shape = 'u8[4096]{0}', space=vmem, size = 0x1000, scoped, tag = 'scoped mem for input reshape']
    %s3 = sshllo.u32 0, 4
    %v4 = vld [vmem:[%s0] sm:%s3]
    %5 = vst [vmem:[#allocation1] sm:%s3] %v4
    %v6 = vld [vmem:[#allocation1] sm:$0x1]
    %vm7 = vcmask 130048
    %8 = vst.msk [vmem:[#allocation0] sm:$0x1] %vm7, %v6
    %s9 = scalar_lea.vmem [#allocation1], 3
    %v10 = vld [vmem:[%s9] sm:$0x1]
    %11 = vrot.lane.b32.xlu0 %v10, 48
    %v12 = vpop.permute.xlu0 %11
    %vm13 = vcmask 523648
    %14 = vst.msk [vmem:[#allocation0] sm:$0x1] %vm13, %v12
    %s15 = scalar_lea.vmem [#allocation1], 2
    %v16 = vld [vmem:[%s15] sm:$0x1]
    %17 = vrot.lane.b32.xlu0 %v16, 32
    %v18 = vpop.permute.xlu0 %17
    %vm19 = vcmask 392448
    %20 = vst.msk [vmem:[#allocation0] sm:$0x1] %vm19, %v18
    %s21 = scalar_lea.vmem [#allocation1], 1
    %v22 = vld [vmem:[%s21] sm:$0x1]
    %23 = vrot.lane.b32.xlu0 %v22, 16
    %v24 = vpop.permute.xlu0 %23
    %vm25 = vcmask 261248
    %26 = vst.msk [vmem:[#allocation0] sm:$0x1] %vm25, %v24
    %s28 = sshllo.u32 0, 1
    %v30 = vld [vmem:[#allocation0] sm:%s28]
    %s31 = sshllo.u32 0, 1
    %32 = vst [vmem:[%s1] sm:%s31] %v30

// kernel: tile.13
$region0: #{tile.13}
  #allocation2 [shape = 's32[1]{0}', space=sflag, size = 0x4, scoped, tag = 'scoped memory for tile.13']
  %s0 = inlined_call_operand.hbm [shape: f32[16], index: 0, kind: input, shape index: {}]
  %s1 = inlined_call_operand.vmem [shape: f32[4,16], index: 1, kind: output, shape index: {}]
  $region1: #{tile.13} parent=0
    #allocation0 [shape = 'u8[512]{0}', space=vmem, size = 0x400, scoped, tag = 'operand span for operand 0']
    #allocation1 [shape = 's32[1]{0}', space=sflag, size = 0x4, scoped, tag = 'scoped memory for tile.13']
    %2 = vsyncpa [#allocation1], 0
    // Predicated region
    $region2: #{tile.13} parent=1 // pred_check
      _
    $region3: #{tile.13} parent=1 // pred_check_branch
      %4 = sbr.rel (0) target = $region5
    $region4: #{tile.13} parent=1 // pred_region
      %s6 = ssub.s32 16, 16
      %7 = vsyncadd [#allocation1], %s6
      %s9 = sshll.u32 [#allocation0], 4
      %s10 = int_to_ptr.vmem [resolvable:$true] %s9
      %12 = dma.hbm_to_vmem [thread:$0]  %s0, 16, %s10, [#allocation1]
    $region5: #{tile.13} parent=1 // pred_fallthru
      _
    // Predicated region
    $region6: #{tile.13} parent=1 // pred_check
      _
    $region7: #{tile.13} parent=1 // pred_check_branch
      %14 = sbr.rel (0) target = $region9
    $region8: #{tile.13} parent=1 // pred_region
      %15 = dma.done [#allocation1], 16
    $region9: #{tile.13} parent=1 // pred_fallthru
      _
    %v16 = vld [vmem:[#allocation0] ss:$0 sm:$0xff]
    %17 = vst [vmem:[%s1] sm:$0xf] %v16
    %18 = vsyncpa [#allocation1], 1

// kernel: tile.18
$region0: #{tile.18}
  #allocation2 [shape = 's32[1]{0}', space=sflag, size = 0x4, scoped, tag = 'scoped memory for tile.18']
  %s0 = inlined_call_operand.hbm [shape: f32[3], index: 0, kind: input, shape index: {}]
  %s1 = inlined_call_operand.vmem [shape: f32[4,3], index: 1, kind: output, shape index: {}]
  $region1: #{tile.18} parent=0
    #allocation0 [shape = 'u8[512]{0}', space=vmem, size = 0x400, scoped, tag = 'operand span for operand 0']
    #allocation1 [shape = 's32[1]{0}', space=sflag, size = 0x4, scoped, tag = 'scoped memory for tile.18']
    %2 = vsyncpa [#allocation1], 0
    // Predicated region
    $region2: #{tile.18} parent=1 // pred_check
      _
    $region3: #{tile.18} parent=1 // pred_check_branch
      %4 = sbr.rel (0) target = $region5
    $region4: #{tile.18} parent=1 // pred_region
      %s6 = ssub.s32 16, 16
      %7 = vsyncadd [#allocation1], %s6
      %s9 = sshll.u32 [#allocation0], 4
      %s10 = int_to_ptr.vmem [resolvable:$true] %s9
      %12 = dma.hbm_to_vmem [thread:$0]  %s0, 16, %s10, [#allocation1]
    $region5: #{tile.18} parent=1 // pred_fallthru
      _
    // Predicated region
    $region6: #{tile.18} parent=1 // pred_check
      _
    $region7: #{tile.18} parent=1 // pred_check_branch
      %14 = sbr.rel (0) target = $region9
    $region8: #{tile.18} parent=1 // pred_region
      %15 = dma.done [#allocation1], 16
    $region9: #{tile.18} parent=1 // pred_fallthru
      _
    %v16 = vld [vmem:[#allocation0] ss:$0 sm:$0xff]
    %17 = vst [vmem:[%s1] sm:$0xf] %v16
    %18 = vsyncpa [#allocation1], 1

// kernel: deconv2net_forward.2
$region0: #{deconv2net_forward.2}
  #allocation0 [shape = 'u32[]', space=smem, size = 0x4, offset = 0x4, fixed_abs, tag = 'smem constant byte address 0x4 - core index']
  #allocation1 [shape = 'u32[144,128]{1,0:T(1,128)}', space=vmem, size = 0x12000, scoped, tag = 'internal scratch']
  %s0 = inlined_call_operand.hbm [shape: f32[128,32], index: 0, kind: input, shape index: {}]
  %s1 = inlined_call_operand.vmem [shape: f32[32,64], index: 1, kind: input, shape index: {}]
  %s2 = inlined_call_operand.vmem [shape: f32[1,64], index: 2, kind: input, shape index: {}]
  %s3 = inlined_call_operand.vmem [shape: f32[128,64], index: 3, kind: output, shape index: {0}]
  %s4 = inlined_call_operand.vmem [shape: f32[1,1,64], index: 4, kind: output, shape index: {1}]
  %s5 = inlined_call_operand.vmem [shape: f32[1,1,64], index: 5, kind: output, shape index: {2}]
  %6 = xla_tuple %s3, %s4, %s5
  %s7 = sld [smem:[#allocation0]]
  $region46: #{deconv2net_forward.2} parent=0
    _
  %s9 = ssub.s32 1, %s7
  %s10 = scalar_select 0, %s9, %s7
  $region1: #{deconv2net_forward.2} parent=0
    #allocation2 [shape = 'u8[65536]{0}', space=vmem, size = 0x10000, scoped, tag = 'input window, operand 0, single buffered']
    #allocation3 [shape = 's32[1]{0}', space=sflag, size = 0x4, scoped, tag = 'scoped memory for deconv2net_forward.2']
    %11 = vsyncpa [#allocation3], 0
    // Predicated region
    $region2: #{deconv2net_forward.2} parent=1 // pred_check
      _
    $region3: #{deconv2net_forward.2} parent=1 // pred_check_branch
      %13 = sbr.rel (0) target = $region5
    $region4: #{deconv2net_forward.2} parent=1 // pred_region
      %s14 = sadd.s32 0, 0
      %s15 = smul.u32 16, %s14
      %s17 = ssub.s32 2048, 2048
      %18 = vsyncadd [#allocation3], %s17
      %s19 = smul.addr %s15, 128
      %s20 = scalar_lea.hbm %s0, %s19
      %s21 = sshll.u32 [#allocation2], 4
      %s22 = int_to_ptr.vmem [resolvable:$true] %s21
      %27 = dma.hbm_to_vmem [thread:$0]  %s20, 2048, %s22, [#allocation3], 128, 128, 8
    $region5: #{deconv2net_forward.2} parent=1 // pred_fallthru
      _
    // Predicated region
    $region6: #{deconv2net_forward.2} parent=1 // pred_check
      _
    $region7: #{deconv2net_forward.2} parent=1 // pred_check_branch
      %29 = sbr.rel (0) target = $region9
    $region8: #{deconv2net_forward.2} parent=1 // pred_region
      _
    $region9: #{deconv2net_forward.2} parent=1 // pred_fallthru
      _
    // Predicated region
    $region10: #{deconv2net_forward.2} parent=1 // pred_check
      _
    $region11: #{deconv2net_forward.2} parent=1 // pred_check_branch
      %31 = sbr.rel (0) target = $region13
    $region12: #{deconv2net_forward.2} parent=1 // pred_region
      _
    $region13: #{deconv2net_forward.2} parent=1 // pred_fallthru
      _
    // Predicated region
    $region14: #{deconv2net_forward.2} parent=1 // pred_check
      _
    $region15: #{deconv2net_forward.2} parent=1 // pred_check_branch
      %33 = sbr.rel (0) target = $region17
    $region16: #{deconv2net_forward.2} parent=1 // pred_region
      %34 = dma.done [#allocation3], 2048
    $region17: #{deconv2net_forward.2} parent=1 // pred_fallthru
      _
    %s35 = sadd.s32 0, 0
    %s36 = smul.u32 16, %s35
    %p37 = scmp.lt.s32.totalorder %s36, 15
    %s38 = scalar_select %p37, %s36, 15
    %s39 = smul.addr %s38, 8
    %s40 = scalar_lea.vmem %s3, %s39
    %s41 = sadd.s32 0, 0
    %s42 = smul.u32 16, %s41
    %s43 = sadd.s32 0, 0
    %s44 = smul.u32 16, %s43
    %p45 = scmp.lt.s32.totalorder %s44, 15
    %s46 = scalar_select %p45, %s44, 15
    %s47 = smul.addr %s46, 8
    %s48 = scalar_lea.vmem %s3, %s47
    %s49 = sadd.s32 0, 0
    %s50 = smul.u32 16, %s49
    %p51 = scmp.eq.s32.totalorder 0, 0
    // Predicated region
    $region18: #{deconv2net_forward.2} parent=1 // pred_check
      %p52 = pneg %p51
    $region19: #{deconv2net_forward.2} parent=1 // pred_check_branch
      %54 = sbr.rel (%p52) target = $region21
    $region20: #{deconv2net_forward.2} parent=1 // pred_region
      %vm55 = vcmask 516096
      %56 = vst.msk [vmem:[%s4] sm:$0x1] %vm55, 0.0
      %57 = vst.msk [vmem:[%s5] sm:$0x1] %vm55, 0.0
    $region21: #{deconv2net_forward.2} parent=1 // pred_fallthru
      _
    %v58 = vld [vmem:[#allocation2] sm:$0xff]
    %v59 = vld [vmem:[#allocation2 + $0x8] sm:$0xff]
    %v60 = vld [vmem:[#allocation2 + $0x10] sm:$0xff]
    %v61 = vld [vmem:[#allocation2 + $0x18] sm:$0xff]
    %v62 = vld [vmem:[#allocation2 + $0x20] sm:$0xff]
    %v63 = vld [vmem:[#allocation2 + $0x28] sm:$0xff]
    %v64 = vld [vmem:[#allocation2 + $0x30] sm:$0xff]
    %v65 = vld [vmem:[#allocation2 + $0x38] sm:$0xff]
    %v66 = vld [vmem:[#allocation2 + $0x40] sm:$0xff]
    %v67 = vld [vmem:[#allocation2 + $0x48] sm:$0xff]
    %v68 = vld [vmem:[#allocation2 + $0x50] sm:$0xff]
    %v69 = vld [vmem:[#allocation2 + $0x58] sm:$0xff]
    %v70 = vld [vmem:[#allocation2 + $0x60] sm:$0xff]
    %v71 = vld [vmem:[#allocation2 + $0x68] sm:$0xff]
    %v72 = vld [vmem:[#allocation2 + $0x70] sm:$0xff]
    %v73 = vld [vmem:[#allocation2 + $0x78] sm:$0xff]
    %v74 = vld [vmem:[%s1] sm:$0xff]
    %v75 = vld [vmem:[%s1 + $0x8] sm:$0xff]
    %v76 = vld [vmem:[%s1 + $0x10] sm:$0xff]
    %v77 = vld [vmem:[%s1 + $0x18] sm:$0xff]
    %v78 = vld [vmem:[%s2] sm:$0x1]
    %v80 = vlaneseq
    %v81 = vshrl.u32 %v80, 7
    %v82 = vsub.s32 0, %v81
    %v83 = vrot.slane %v78, %v82
    %vm85 = vcmask 261120
    %v87 = vsel %vm85, %v58, 0
    %v90 = vsel %vm85, %v59, 0
    %v93 = vsel %vm85, %v60, 0
    %v96 = vsel %vm85, %v61, 0
    %v99 = vsel %vm85, %v62, 0
    %v102 = vsel %vm85, %v63, 0
    %v105 = vsel %vm85, %v64, 0
    %v108 = vsel %vm85, %v65, 0
    %v111 = vsel %vm85, %v66, 0
    %v114 = vsel %vm85, %v67, 0
    %v117 = vsel %vm85, %v68, 0
    %v120 = vsel %vm85, %v69, 0
    %v123 = vsel %vm85, %v70, 0
    %v126 = vsel %vm85, %v71, 0
    %v129 = vsel %vm85, %v72, 0
    %v132 = vsel %vm85, %v73, 0
    %134 = vmatprep.subr.mxu0 0.0
    %135 = vmatpush1.msra.mxu0 %v74
    %136 = vmatprep.subr.mxu0 0.0
    %137 = vmatpush1.msra.mxu0 %v75
    %138 = vmatprep.subr.mxu0 0.0
    %139 = vmatpush1.msra.mxu0 %v76
    %140 = vmatprep.subr.mxu0 0.0
    %141 = vmatpush1.msra.mxu0 %v77
    %142 = vmatprep.subr.mxu0 0.0
    %143 = vmatpush1.msra.mxu0 0.0
    %144 = vmatprep.subr.mxu0 0.0
    %145 = vmatpush1.msra.mxu0 0.0
    %146 = vmatprep.subr.mxu0 0.0
    %147 = vmatpush1.msra.mxu0 0.0
    %148 = vmatprep.subr.mxu0 0.0
    %149 = vmatpush1.msra.mxu0 0.0
    %150 = vmatprep.subr.mxu0 0.0
    %151 = vmatpush1.msra.mxu0 0.0
    %152 = vmatprep.subr.mxu0 0.0
    %153 = vmatpush1.msra.mxu0 0.0
    %154 = vmatprep.subr.mxu0 0.0
    %155 = vmatpush1.msra.mxu0 0.0
    %156 = vmatprep.subr.mxu0 0.0
    %157 = vmatpush1.msra.mxu0 0.0
    %158 = vmatprep.subr.mxu0 0.0
    %159 = vmatpush1.msra.mxu0 0.0
    %160 = vmatprep.subr.mxu0 0.0
    %161 = vmatpush1.msra.mxu0 0.0
    %162 = vmatprep.subr.mxu0 0.0
    %163 = vmatpush1.msra.mxu0 0.0
    %164 = vmatprep.subr.mxu0 0.0
    %165 = vmatpush1.msra.mxu0 0.0
    %166 = vmatprep.subr.mxu0 0.0
    %167 = vmatpush1.msra.mxu0 0.0
    %168 = vmatprep.subr.mxu0 0.0
    %169 = vmatpush1.msra.mxu0 0.0
    %170 = vmatprep.subr.mxu0 0.0
    %171 = vmatpush1.msra.mxu0 0.0
    %172 = vmatprep.subr.mxu0 0.0
    %173 = vmatpush1.msra.mxu0 0.0
    %174 = vmatprep.subr.mxu0 0.0
    %175 = vmatpush1.msra.mxu0 0.0
    %176 = vmatprep.subr.mxu0 0.0
    %177 = vmatpush1.msra.mxu0 0.0
    %178 = vmatprep.subr.mxu0 0.0
    %179 = vmatpush1.msra.mxu0 0.0
    %180 = vmatprep.subr.mxu0 0.0
    %181 = vmatpush1.msra.mxu0 0.0
    %182 = vmatprep.subr.mxu0 0.0
    %183 = vmatpush1.msra.mxu0 0.0
    %184 = vmatprep.subr.mxu0 0.0
    %185 = vmatpush1.msra.mxu0 0.0
    %186 = vmatprep.subr.mxu0 0.0
    %187 = vmatpush1.msra.mxu0 0.0
    %188 = vmatprep.subr.mxu0 0.0
    %189 = vmatpush1.msra.mxu0 0.0
    %190 = vmatprep.subr.mxu0 0.0
    %191 = vmatpush1.msra.mxu0 0.0
    %192 = vmatprep.subr.mxu0 0.0
    %193 = vmatpush1.msra.mxu0 0.0
    %194 = vmatprep.subr.mxu0 0.0
    %195 = vmatpush1.msra.mxu0 0.0
    %196 = vmatprep.subr.mxu0 0.0
    %197 = vmatpush1.msra.mxu0 0.0
    %198 = vmatprep.mubr.f32.mxu0 0.0
    %199 = vmatmul.mubr.f32.gmra.mrb[0].mxu0 %v87
    %v200 = vpop.f32.mrb[0].mxu0
    %v201 = vadd.f32 %v83, %v200
    %v202 = vpop.f32.mrb[0].mxu0
    %203 = vmatprep.mubr.f32.mxu0 0.0
    %204 = vmatmul.mubr.f32.gmra.mrb[0].mxu0 %v90
    %v205 = vpop.f32.mrb[0].mxu0
    %v206 = vadd.f32 %v83, %v205
    %v207 = vpop.f32.mrb[0].mxu0
    %208 = vmatprep.mubr.f32.mxu0 0.0
    %209 = vmatmul.mubr.f32.gmra.mrb[0].mxu0 %v93
    %v210 = vpop.f32.mrb[0].mxu0
    %v211 = vadd.f32 %v83, %v210
    %v212 = vpop.f32.mrb[0].mxu0
    %213 = vmatprep.mubr.f32.mxu0 0.0
    %214 = vmatmul.mubr.f32.gmra.mrb[0].mxu0 %v96
    %v215 = vpop.f32.mrb[0].mxu0
    %v216 = vadd.f32 %v83, %v215
    %v217 = vpop.f32.mrb[0].mxu0
    %218 = vmatprep.mubr.f32.mxu0 0.0
    %219 = vmatmul.mubr.f32.gmra.mrb[0].mxu0 %v99
    %v220 = vpop.f32.mrb[0].mxu0
    %v221 = vadd.f32 %v83, %v220
    %v222 = vpop.f32.mrb[0].mxu0
    %223 = vmatprep.mubr.f32.mxu0 0.0
    %224 = vmatmul.mubr.f32.gmra.mrb[0].mxu0 %v102
    %v225 = vpop.f32.mrb[0].mxu0
    %v226 = vadd.f32 %v83, %v225
    %v227 = vpop.f32.mrb[0].mxu0
    %228 = vmatprep.mubr.f32.mxu0 0.0
    %229 = vmatmul.mubr.f32.gmra.mrb[0].mxu0 %v105
    %v230 = vpop.f32.mrb[0].mxu0
    %v231 = vadd.f32 %v83, %v230
    %v232 = vpop.f32.mrb[0].mxu0
    %233 = vmatprep.mubr.f32.mxu0 0.0
    %234 = vmatmul.mubr.f32.gmra.mrb[0].mxu0 %v108
    %v235 = vpop.f32.mrb[0].mxu0
    %v236 = vadd.f32 %v83, %v235
    %v237 = vpop.f32.mrb[0].mxu0
    %238 = vmatprep.mubr.f32.mxu0 0.0
    %239 = vmatmul.mubr.f32.gmra.mrb[0].mxu0 %v111
    %v240 = vpop.f32.mrb[0].mxu0
    %v241 = vadd.f32 %v83, %v240
    %v242 = vpop.f32.mrb[0].mxu0
    %243 = vmatprep.mubr.f32.mxu0 0.0
    %244 = vmatmul.mubr.f32.gmra.mrb[0].mxu0 %v114
    %v245 = vpop.f32.mrb[0].mxu0
    %v246 = vadd.f32 %v83, %v245
    %v247 = vpop.f32.mrb[0].mxu0
    %248 = vmatprep.mubr.f32.mxu0 0.0
    %249 = vmatmul.mubr.f32.gmra.mrb[0].mxu0 %v117
    %v250 = vpop.f32.mrb[0].mxu0
    %v251 = vadd.f32 %v83, %v250
    %v252 = vpop.f32.mrb[0].mxu0
    %253 = vmatprep.mubr.f32.mxu0 0.0
    %254 = vmatmul.mubr.f32.gmra.mrb[0].mxu0 %v120
    %v255 = vpop.f32.mrb[0].mxu0
    %v256 = vadd.f32 %v83, %v255
    %v257 = vpop.f32.mrb[0].mxu0
    %258 = vmatprep.mubr.f32.mxu0 0.0
    %259 = vmatmul.mubr.f32.gmra.mrb[0].mxu0 %v123
    %v260 = vpop.f32.mrb[0].mxu0
    %v261 = vadd.f32 %v83, %v260
    %v262 = vpop.f32.mrb[0].mxu0
    %263 = vmatprep.mubr.f32.mxu0 0.0
    %264 = vmatmul.mubr.f32.gmra.mrb[0].mxu0 %v126
    %v265 = vpop.f32.mrb[0].mxu0
    %v266 = vadd.f32 %v83, %v265
    %v267 = vpop.f32.mrb[0].mxu0
    %268 = vmatprep.mubr.f32.mxu0 0.0
    %269 = vmatmul.mubr.f32.gmra.mrb[0].mxu0 %v129
    %v270 = vpop.f32.mrb[0].mxu0
    %v271 = vadd.f32 %v83, %v270
    %v272 = vpop.f32.mrb[0].mxu0
    %273 = vmatprep.mubr.f32.mxu0 0.0
    %274 = vmatmul.mubr.f32.gmra.mrb[0].mxu0 %v132
    %v275 = vpop.f32.mrb[0].mxu0
    %v276 = vadd.f32 %v83, %v275
    %v277 = vpop.f32.mrb[0].mxu0
    %278 = vdwg.mxu0
    %v279 = vld [vmem:[%s4] sm:$0x1]
    %vm280 = vcmask 523264
    %v281 = vsel %vm280, %v201, 0.0
    %v282 = vsel %vm280, %v206, 0.0
    %v283 = vadd.f32 %v281, %v282
    %v284 = vsel %vm280, %v211, 0.0
    %v285 = vadd.f32 %v283, %v284
    %v286 = vsel %vm280, %v216, 0.0
    %v287 = vadd.f32 %v285, %v286
    %v288 = vsel %vm280, %v221, 0.0
    %v289 = vadd.f32 %v287, %v288
    %v290 = vsel %vm280, %v226, 0.0
    %v291 = vadd.f32 %v289, %v290
    %v292 = vsel %vm280, %v231, 0.0
    %v293 = vadd.f32 %v291, %v292
    %v294 = vsel %vm280, %v236, 0.0
    %v295 = vadd.f32 %v293, %v294
    %v296 = vsel %vm280, %v241, 0.0
    %v297 = vadd.f32 %v295, %v296
    %v298 = vsel %vm280, %v246, 0.0
    %v299 = vadd.f32 %v297, %v298
    %v300 = vsel %vm280, %v251, 0.0
    %v301 = vadd.f32 %v299, %v300
    %v302 = vsel %vm280, %v256, 0.0
    %v303 = vadd.f32 %v301, %v302
    %v304 = vsel %vm280, %v261, 0.0
    %v305 = vadd.f32 %v303, %v304
    %v306 = vsel %vm280, %v266, 0.0
    %v307 = vadd.f32 %v305, %v306
    %v308 = vsel %vm280, %v271, 0.0
    %v309 = vadd.f32 %v307, %v308
    %v310 = vsel %vm280, %v276, 0.0
    %v311 = vadd.f32 %v309, %v310
    %v312 = vrot.slane %v311, 4
    %v313 = vadd.f32 %v311, %v312
    %v314 = vrot.slane %v313, 2
    %v315 = vadd.f32 %v313, %v314
    %v316 = vrot.slane %v315, 1
    %v317 = vadd.f32 %v315, %v316
    %v318 = vadd.f32 %v279, %v317
    %vm319 = vcmask 516096
    %320 = vst.msk [vmem:[%s4] sm:$0x1] %vm319, %v318
    %v321 = vld [vmem:[%s5] sm:$0x1]
    %v322 = vmul.f32 %v201, %v201
    %v323 = vmul.f32 %v206, %v206
    %v324 = vmul.f32 %v211, %v211
    %v325 = vmul.f32 %v216, %v216
    %v326 = vmul.f32 %v221, %v221
    %v327 = vmul.f32 %v226, %v226
    %v328 = vmul.f32 %v231, %v231
    %v329 = vmul.f32 %v236, %v236
    %v330 = vmul.f32 %v241, %v241
    %v331 = vmul.f32 %v246, %v246
    %v332 = vmul.f32 %v251, %v251
    %v333 = vmul.f32 %v256, %v256
    %v334 = vmul.f32 %v261, %v261
    %v335 = vmul.f32 %v266, %v266
    %v336 = vmul.f32 %v271, %v271
    %v337 = vmul.f32 %v276, %v276
    %v338 = vsel %vm280, %v322, 0.0
    %v339 = vsel %vm280, %v323, 0.0
    %v340 = vadd.f32 %v338, %v339
    %v341 = vsel %vm280, %v324, 0.0
    %v342 = vadd.f32 %v340, %v341
    %v343 = vsel %vm280, %v325, 0.0
    %v344 = vadd.f32 %v342, %v343
    %v345 = vsel %vm280, %v326, 0.0
    %v346 = vadd.f32 %v344, %v345
    %v347 = vsel %vm280, %v327, 0.0
    %v348 = vadd.f32 %v346, %v347
    %v349 = vsel %vm280, %v328, 0.0
    %v350 = vadd.f32 %v348, %v349
    %v351 = vsel %vm280, %v329, 0.0
    %v352 = vadd.f32 %v350, %v351
    %v353 = vsel %vm280, %v330, 0.0
    %v354 = vadd.f32 %v352, %v353
    %v355 = vsel %vm280, %v331, 0.0
    %v356 = vadd.f32 %v354, %v355
    %v357 = vsel %vm280, %v332, 0.0
    %v358 = vadd.f32 %v356, %v357
    %v359 = vsel %vm280, %v333, 0.0
    %v360 = vadd.f32 %v358, %v359
    %v361 = vsel %vm280, %v334, 0.0
    %v362 = vadd.f32 %v360, %v361
    %v363 = vsel %vm280, %v335, 0.0
    %v364 = vadd.f32 %v362, %v363
    %v365 = vsel %vm280, %v336, 0.0
    %v366 = vadd.f32 %v364, %v365
    %v367 = vsel %vm280, %v337, 0.0
    %v368 = vadd.f32 %v366, %v367
    %v369 = vrot.slane %v368, 4
    %v370 = vadd.f32 %v368, %v369
    %v371 = vrot.slane %v370, 2
    %v372 = vadd.f32 %v370, %v371
    %v373 = vrot.slane %v372, 1
    %v374 = vadd.f32 %v372, %v373
    %v375 = vadd.f32 %v321, %v374
    %376 = vst.msk [vmem:[%s5] sm:$0x1] %vm319, %v375
    %377 = vst.msk [vmem:[%s48] sm:$0xff] %vm280, %v201
    %378 = vst.msk [vmem:[%s48 + $0x8] sm:$0xff] %vm280, %v206
    %379 = vst.msk [vmem:[%s48 + $0x10] sm:$0xff] %vm280, %v211
    %380 = vst.msk [vmem:[%s48 + $0x18] sm:$0xff] %vm280, %v216
    %381 = vst.msk [vmem:[%s48 + $0x20] sm:$0xff] %vm280, %v221
    %382 = vst.msk [vmem:[%s48 + $0x28] sm:$0xff] %vm280, %v226
    %383 = vst.msk [vmem:[%s48 + $0x30] sm:$0xff] %vm280, %v231
    %384 = vst.msk [vmem:[%s48 + $0x38] sm:$0xff] %vm280, %v236
    %385 = vst.msk [vmem:[%s48 + $0x40] sm:$0xff] %vm280, %v241
    %386 = vst.msk [vmem:[%s48 + $0x48] sm:$0xff] %vm280, %v246
    %387 = vst.msk [vmem:[%s48 + $0x50] sm:$0xff] %vm280, %v251
    %388 = vst.msk [vmem:[%s48 + $0x58] sm:$0xff] %vm280, %v256
    %389 = vst.msk [vmem:[%s48 + $0x60] sm:$0xff] %vm280, %v261
    %390 = vst.msk [vmem:[%s48 + $0x68] sm:$0xff] %vm280, %v266
    %391 = vst.msk [vmem:[%s48 + $0x70] sm:$0xff] %vm280, %v271
    %392 = vst.msk [vmem:[%s48 + $0x78] sm:$0xff] %vm280, %v276
    %s393 = sadd.s32 0, 0
    %s394 = smul.u32 16, %s393
    %p395 = scmp.lt.s32.totalorder %s394, 15
    %s396 = scalar_select %p395, %s394, 15
    %s397 = smul.addr %s396, 8
    %s398 = scalar_lea.vmem %s3, %s397
    // Predicated region
    $region22: #{deconv2net_forward.2} parent=1 // pred_check
      _
    $region23: #{deconv2net_forward.2} parent=1 // pred_check_branch
      %400 = sbr.rel (0) target = $region25
    $region24: #{deconv2net_forward.2} parent=1 // pred_region
      %s401 = sadd.s32 0, 0
      %s402 = smul.u32 16, %s401
    $region25: #{deconv2net_forward.2} parent=1 // pred_fallthru
      _
    // Predicated region
    $region26: #{deconv2net_forward.2} parent=1 // pred_check
      _
    $region27: #{deconv2net_forward.2} parent=1 // pred_check_branch
      %404 = sbr.rel (0) target = $region29
    $region28: #{deconv2net_forward.2} parent=1 // pred_region
      _
    $region29: #{deconv2net_forward.2} parent=1 // pred_fallthru
      _
    // Predicated region
    $region30: #{deconv2net_forward.2} parent=1 // pred_check
      _
    $region31: #{deconv2net_forward.2} parent=1 // pred_check_branch
      %406 = sbr.rel (0) target = $region33
    $region32: #{deconv2net_forward.2} parent=1 // pred_region
      _
    $region33: #{deconv2net_forward.2} parent=1 // pred_fallthru
      _
    // Predicated region
    $region34: #{deconv2net_forward.2} parent=1 // pred_check
      _
    $region35: #{deconv2net_forward.2} parent=1 // pred_check_branch
      %408 = sbr.rel (0) target = $region37
    $region36: #{deconv2net_forward.2} parent=1 // pred_region
      %s409 = sadd.s32 0, 0
      %s410 = smul.u32 16, %s409
      %p411 = scmp.lt.s32.totalorder %s410, 15
      %s412 = scalar_select %p411, %s410, 15
      %s413 = smul.addr %s412, 8
      %s414 = scalar_lea.vmem %s3, %s413
    $region37: #{deconv2net_forward.2} parent=1 // pred_fallthru
      _
    // Predicated region
    $region38: #{deconv2net_forward.2} parent=1 // pred_check
      _
    $region39: #{deconv2net_forward.2} parent=1 // pred_check_branch
      %416 = sbr.rel (0) target = $region41
    $region40: #{deconv2net_forward.2} parent=1 // pred_region
      _
    $region41: #{deconv2net_forward.2} parent=1 // pred_fallthru
      _
    // Predicated region
    $region42: #{deconv2net_forward.2} parent=1 // pred_check
      _
    $region43: #{deconv2net_forward.2} parent=1 // pred_check_branch
      %418 = sbr.rel (0) target = $region45
    $region44: #{deconv2net_forward.2} parent=1 // pred_region
      _
    $region45: #{deconv2net_forward.2} parent=1 // pred_fallthru
      _
    %419 = vsyncpa [#allocation3], 1

// kernel: deconv2net_forward.3
$region0: #{deconv2net_forward.3}
  #allocation0 [shape = 'u32[]', space=smem, size = 0x4, offset = 0x4, fixed_abs, tag = 'smem constant byte address 0x4 - core index']
  #allocation1 [shape = 'u32[144,128]{1,0:T(1,128)}', space=vmem, size = 0x12000, scoped, tag = 'internal scratch']
  %s0 = inlined_call_operand.vmem [shape: f32[512,16], index: 0, kind: input, shape index: {}]
  %s1 = inlined_call_operand.vmem [shape: f32[16,12], index: 1, kind: input, shape index: {}]
  %s2 = inlined_call_operand.vmem [shape: f32[12,1], index: 2, kind: input, shape index: {}]
  %s3 = inlined_call_operand.vmem [shape: f32[12,512], index: 3, kind: output, shape index: {}]
  %s4 = sld [smem:[#allocation0]]
  $region22: #{deconv2net_forward.3} parent=0
    _
  %s6 = ssub.s32 1, %s4
  %s7 = scalar_select 0, %s6, %s4
  // Predicated region
  $region2: #{deconv2net_forward.3} parent=0 // pred_check
    _
  $region3: #{deconv2net_forward.3} parent=0 // pred_check_branch
    %9 = sbr.rel (0) target = $region5
  $region4: #{deconv2net_forward.3} parent=0 // pred_region
    _
  $region5: #{deconv2net_forward.3} parent=0 // pred_fallthru
    _
  // Predicated region
  $region6: #{deconv2net_forward.3} parent=0 // pred_check
    _
  $region7: #{deconv2net_forward.3} parent=0 // pred_check_branch
    %11 = sbr.rel (0) target = $region9
  $region8: #{deconv2net_forward.3} parent=0 // pred_region
    _
  $region9: #{deconv2net_forward.3} parent=0 // pred_fallthru
    _
  // Predicated region
  $region10: #{deconv2net_forward.3} parent=0 // pred_check
    _
  $region11: #{deconv2net_forward.3} parent=0 // pred_check_branch
    %13 = sbr.rel (0) target = $region13
  $region12: #{deconv2net_forward.3} parent=0 // pred_region
    _
  $region13: #{deconv2net_forward.3} parent=0 // pred_fallthru
    _
  %v14 = vld [vmem:[%s1] sm:$0xff]
  %v15 = vld [vmem:[%s1 + $0x8] sm:$0xff]
  %v16 = vld [vmem:[%s0] sm:$0xff]
  %v17 = vld [vmem:[%s0 + $0x8] sm:$0xff]
  %v18 = vld [vmem:[%s0 + $0x10] sm:$0xff]
  %v19 = vld [vmem:[%s0 + $0x18] sm:$0xff]
  %v20 = vld [vmem:[%s0 + $0x20] sm:$0xff]
  %v21 = vld [vmem:[%s0 + $0x28] sm:$0xff]
  %v22 = vld [vmem:[%s0 + $0x30] sm:$0xff]
  %v23 = vld [vmem:[%s0 + $0x38] sm:$0xff]
  %v24 = vld [vmem:[%s0 + $0x40] sm:$0xff]
  %v25 = vld [vmem:[%s0 + $0x48] sm:$0xff]
  %v26 = vld [vmem:[%s0 + $0x50] sm:$0xff]
  %v27 = vld [vmem:[%s0 + $0x58] sm:$0xff]
  %v28 = vld [vmem:[%s0 + $0x60] sm:$0xff]
  %v29 = vld [vmem:[%s0 + $0x68] sm:$0xff]
  %v30 = vld [vmem:[%s0 + $0x70] sm:$0xff]
  %v31 = vld [vmem:[%s0 + $0x78] sm:$0xff]
  %v32 = vld [vmem:[%s0 + $0x80] sm:$0xff]
  %v33 = vld [vmem:[%s0 + $0x88] sm:$0xff]
  %v34 = vld [vmem:[%s0 + $0x90] sm:$0xff]
  %v35 = vld [vmem:[%s0 + $0x98] sm:$0xff]
  %v36 = vld [vmem:[%s0 + $0xa0] sm:$0xff]
  %v37 = vld [vmem:[%s0 + $0xa8] sm:$0xff]
  %v38 = vld [vmem:[%s0 + $0xb0] sm:$0xff]
  %v39 = vld [vmem:[%s0 + $0xb8] sm:$0xff]
  %v40 = vld [vmem:[%s0 + $0xc0] sm:$0xff]
  %v41 = vld [vmem:[%s0 + $0xc8] sm:$0xff]
  %v42 = vld [vmem:[%s0 + $0xd0] sm:$0xff]
  %v43 = vld [vmem:[%s0 + $0xd8] sm:$0xff]
  %v44 = vld [vmem:[%s0 + $0xe0] sm:$0xff]
  %v45 = vld [vmem:[%s0 + $0xe8] sm:$0xff]
  %v46 = vld [vmem:[%s0 + $0xf0] sm:$0xff]
  %v47 = vld [vmem:[%s0 + $0xf8] sm:$0xff]
  %v48 = vld [vmem:[%s0 + $0x100] sm:$0xff]
  %v49 = vld [vmem:[%s0 + $0x108] sm:$0xff]
  %v50 = vld [vmem:[%s0 + $0x110] sm:$0xff]
  %v51 = vld [vmem:[%s0 + $0x118] sm:$0xff]
  %v52 = vld [vmem:[%s0 + $0x120] sm:$0xff]
  %v53 = vld [vmem:[%s0 + $0x128] sm:$0xff]
  %v54 = vld [vmem:[%s0 + $0x130] sm:$0xff]
  %v55 = vld [vmem:[%s0 + $0x138] sm:$0xff]
  %v56 = vld [vmem:[%s0 + $0x140] sm:$0xff]
  %v57 = vld [vmem:[%s0 + $0x148] sm:$0xff]
  %v58 = vld [vmem:[%s0 + $0x150] sm:$0xff]
  %v59 = vld [vmem:[%s0 + $0x158] sm:$0xff]
  %v60 = vld [vmem:[%s0 + $0x160] sm:$0xff]
  %v61 = vld [vmem:[%s0 + $0x168] sm:$0xff]
  %v62 = vld [vmem:[%s0 + $0x170] sm:$0xff]
  %v63 = vld [vmem:[%s0 + $0x178] sm:$0xff]
  %v64 = vld [vmem:[%s0 + $0x180] sm:$0xff]
  %v65 = vld [vmem:[%s0 + $0x188] sm:$0xff]
  %v66 = vld [vmem:[%s0 + $0x190] sm:$0xff]
  %v67 = vld [vmem:[%s0 + $0x198] sm:$0xff]
  %v68 = vld [vmem:[%s0 + $0x1a0] sm:$0xff]
  %v69 = vld [vmem:[%s0 + $0x1a8] sm:$0xff]
  %v70 = vld [vmem:[%s0 + $0x1b0] sm:$0xff]
  %v71 = vld [vmem:[%s0 + $0x1b8] sm:$0xff]
  %v72 = vld [vmem:[%s0 + $0x1c0] sm:$0xff]
  %v73 = vld [vmem:[%s0 + $0x1c8] sm:$0xff]
  %v74 = vld [vmem:[%s0 + $0x1d0] sm:$0xff]
  %v75 = vld [vmem:[%s0 + $0x1d8] sm:$0xff]
  %v76 = vld [vmem:[%s0 + $0x1e0] sm:$0xff]
  %v77 = vld [vmem:[%s0 + $0x1e8] sm:$0xff]
  %v78 = vld [vmem:[%s0 + $0x1f0] sm:$0xff]
  %v79 = vld [vmem:[%s0 + $0x1f8] sm:$0xff]
  %v80 = vld [vmem:[%s2] sm:$0xff]
  %v81 = vld [vmem:[%s2 + $0x8] sm:$0xf]
  %83 = vset.pattern.permute.xlu0 0
  %84 = vperm.xlu0 %83, %v80
  %v85 = vpop.permute.xlu0 %84
  %88 = vset.pattern.permute.xlu0 0
  %89 = vperm.xlu0 %88, %v81
  %v90 = vpop.permute.xlu0 %89
  %92 = vxpose.xlu0.b32.start [1/16] %v14, 128
  %93 = vxpose.xlu0.b32.cont [2/16] %v15, 128
  %94 = vxpose.xlu0.b32.cont [3/16] 0.0, 128
  %95 = vxpose.xlu0.b32.cont [4/16] 0.0, 128
  %96 = vxpose.xlu0.b32.cont [5/16] 0.0, 128
  %97 = vxpose.xlu0.b32.cont [6/16] 0.0, 128
  %98 = vxpose.xlu0.b32.cont [7/16] 0.0, 128
  %99 = vxpose.xlu0.b32.cont [8/16] 0.0, 128
  %100 = vxpose.xlu0.b32.cont [9/16] 0.0, 128
  %101 = vxpose.xlu0.b32.cont [10/16] 0.0, 128
  %102 = vxpose.xlu0.b32.cont [11/16] 0.0, 128
  %103 = vxpose.xlu0.b32.cont [12/16] 0.0, 128
  %104 = vxpose.xlu0.b32.cont [13/16] 0.0, 128
  %105 = vxpose.xlu0.b32.cont [14/16] 0.0, 128
  %106 = vxpose.xlu0.b32.cont [15/16] 0.0, 128
  %107 = vxpose.xlu0.b32.end [16/16] 0.0, 128
  %v108 = vpop.trf.xlu0
  %v109 = vpop.trf.xlu0
  %v110 = vpop.trf.xlu0
  %v111 = vpop.trf.xlu0
  %v112 = vpop.trf.xlu0
  %v113 = vpop.trf.xlu0
  %v114 = vpop.trf.xlu0
  %v115 = vpop.trf.xlu0
  %v116 = vpop.trf.xlu0
  %v117 = vpop.trf.xlu0
  %v118 = vpop.trf.xlu0
  %v119 = vpop.trf.xlu0
  %v120 = vpop.trf.xlu0
  %v121 = vpop.trf.xlu0
  %v122 = vpop.trf.xlu0
  %v123 = vpop.trf.xlu0
  %vm124 = vcmask 130048
  %v126 = vsel %vm124, %v108, 0
  %v129 = vsel %vm124, %v109, 0
  %v132 = vsel %vm124, %v16, 0
  %v135 = vsel %vm124, %v17, 0
  %v138 = vsel %vm124, %v18, 0
  %v141 = vsel %vm124, %v19, 0
  %v144 = vsel %vm124, %v20, 0
  %v147 = vsel %vm124, %v21, 0
  %v150 = vsel %vm124, %v22, 0
  %v153 = vsel %vm124, %v23, 0
  %v156 = vsel %vm124, %v24, 0
  %v159 = vsel %vm124, %v25, 0
  %v162 = vsel %vm124, %v26, 0
  %v165 = vsel %vm124, %v27, 0
  %v168 = vsel %vm124, %v28, 0
  %v171 = vsel %vm124, %v29, 0
  %v174 = vsel %vm124, %v30, 0
  %v177 = vsel %vm124, %v31, 0
  %v180 = vsel %vm124, %v32, 0
  %v183 = vsel %vm124, %v33, 0
  %v186 = vsel %vm124, %v34, 0
  %v189 = vsel %vm124, %v35, 0
  %v192 = vsel %vm124, %v36, 0
  %v195 = vsel %vm124, %v37, 0
  %v198 = vsel %vm124, %v38, 0
  %v201 = vsel %vm124, %v39, 0
  %v204 = vsel %vm124, %v40, 0
  %v207 = vsel %vm124, %v41, 0
  %v210 = vsel %vm124, %v42, 0
  %v213 = vsel %vm124, %v43, 0
  %v216 = vsel %vm124, %v44, 0
  %v219 = vsel %vm124, %v45, 0
  %v222 = vsel %vm124, %v46, 0
  %v225 = vsel %vm124, %v47, 0
  %v228 = vsel %vm124, %v48, 0
  %v231 = vsel %vm124, %v49, 0
  %v234 = vsel %vm124, %v50, 0
  %v237 = vsel %vm124, %v51, 0
  %v240 = vsel %vm124, %v52, 0
  %v243 = vsel %vm124, %v53, 0
  %v246 = vsel %vm124, %v54, 0
  %v249 = vsel %vm124, %v55, 0
  %v252 = vsel %vm124, %v56, 0
  %v255 = vsel %vm124, %v57, 0
  %v258 = vsel %vm124, %v58, 0
  %v261 = vsel %vm124, %v59, 0
  %v264 = vsel %vm124, %v60, 0
  %v267 = vsel %vm124, %v61, 0
  %v270 = vsel %vm124, %v62, 0
  %v273 = vsel %vm124, %v63, 0
  %v276 = vsel %vm124, %v64, 0
  %v279 = vsel %vm124, %v65, 0
  %v282 = vsel %vm124, %v66, 0
  %v285 = vsel %vm124, %v67, 0
  %v288 = vsel %vm124, %v68, 0
  %v291 = vsel %vm124, %v69, 0
  %v294 = vsel %vm124, %v70, 0
  %v297 = vsel %vm124, %v71, 0
  %v300 = vsel %vm124, %v72, 0
  %v303 = vsel %vm124, %v73, 0
  %v306 = vsel %vm124, %v74, 0
  %v309 = vsel %vm124, %v75, 0
  %v312 = vsel %vm124, %v76, 0
  %v315 = vsel %vm124, %v77, 0
  %v318 = vsel %vm124, %v78, 0
  %v321 = vsel %vm124, %v79, 0
  %323 = vmatprep.subr.mxu0 0.0
  %324 = vmatpush1.xpose.msra.mxu0 %v132
  %325 = vmatprep.subr.mxu0 0.0
  %326 = vmatpush1.xpose.msra.mxu0 %v135
  %327 = vmatprep.subr.mxu0 0.0
  %328 = vmatpush1.xpose.msra.mxu0 %v138
  %329 = vmatprep.subr.mxu0 0.0
  %330 = vmatpush1.xpose.msra.mxu0 %v141
  %331 = vmatprep.subr.mxu0 0.0
  %332 = vmatpush1.xpose.msra.mxu0 %v144
  %333 = vmatprep.subr.mxu0 0.0
  %334 = vmatpush1.xpose.msra.mxu0 %v147
  %335 = vmatprep.subr.mxu0 0.0
  %336 = vmatpush1.xpose.msra.mxu0 %v150
  %337 = vmatprep.subr.mxu0 0.0
  %338 = vmatpush1.xpose.msra.mxu0 %v153
  %339 = vmatprep.subr.mxu0 0.0
  %340 = vmatpush1.xpose.msra.mxu0 %v156
  %341 = vmatprep.subr.mxu0 0.0
  %342 = vmatpush1.xpose.msra.mxu0 %v159
  %343 = vmatprep.subr.mxu0 0.0
  %344 = vmatpush1.xpose.msra.mxu0 %v162
  %345 = vmatprep.subr.mxu0 0.0
  %346 = vmatpush1.xpose.msra.mxu0 %v165
  %347 = vmatprep.subr.mxu0 0.0
  %348 = vmatpush1.xpose.msra.mxu0 %v168
  %349 = vmatprep.subr.mxu0 0.0
  %350 = vmatpush1.xpose.msra.mxu0 %v171
  %351 = vmatprep.subr.mxu0 0.0
  %352 = vmatpush1.xpose.msra.mxu0 %v174
  %353 = vmatprep.subr.mxu0 0.0
  %354 = vmatpush1.xpose.msra.mxu0 %v177
  %355 = vmatprep.subr.mxu0 0.0
  %356 = vmatpush1.xpose.msra.mxu0 %v180
  %357 = vmatprep.subr.mxu0 0.0
  %358 = vmatpush1.xpose.msra.mxu0 %v183
  %359 = vmatprep.subr.mxu0 0.0
  %360 = vmatpush1.xpose.msra.mxu0 %v186
  %361 = vmatprep.subr.mxu0 0.0
  %362 = vmatpush1.xpose.msra.mxu0 %v189
  %363 = vmatprep.subr.mxu0 0.0
  %364 = vmatpush1.xpose.msra.mxu0 %v192
  %365 = vmatprep.subr.mxu0 0.0
  %366 = vmatpush1.xpose.msra.mxu0 %v195
  %367 = vmatprep.subr.mxu0 0.0
  %368 = vmatpush1.xpose.msra.mxu0 %v198
  %369 = vmatprep.subr.mxu0 0.0
  %370 = vmatpush1.xpose.msra.mxu0 %v201
  %371 = vmatprep.subr.mxu0 0.0
  %372 = vmatpush1.xpose.msra.mxu0 %v204
  %373 = vmatprep.subr.mxu0 0.0
  %374 = vmatpush1.xpose.msra.mxu0 %v207
  %375 = vmatprep.subr.mxu0 0.0
  %376 = vmatpush1.xpose.msra.mxu0 %v210
  %377 = vmatprep.subr.mxu0 0.0
  %378 = vmatpush1.xpose.msra.mxu0 %v213
  %379 = vmatprep.subr.mxu0 0.0
  %380 = vmatpush1.xpose.msra.mxu0 %v216
  %381 = vmatprep.subr.mxu0 0.0
  %382 = vmatpush1.xpose.msra.mxu0 %v219
  %383 = vmatprep.subr.mxu0 0.0
  %384 = vmatpush1.xpose.msra.mxu0 %v222
  %385 = vmatprep.subr.mxu0 0.0
  %386 = vmatpush1.xpose.msra.mxu0 %v225
  %387 = vmatprep.mubr.f32.mxu0 0.0
  %388 = vmatmul.mubr.f32.gmra.mrb[0].mxu0 %v126
  %v389 = vpop.f32.mrb[0].mxu0
  %v390 = vadd.f32 %v85, %v389
  %v391 = vpop.f32.mrb[0].mxu0
  %v392 = vadd.f32 %v85, %v391
  %393 = vmatprep.mubr.f32.mxu0 0.0
  %394 = vmatmul.mubr.f32.gmra.mrb[0].mxu0 %v129
  %v395 = vpop.f32.mrb[0].mxu0
  %v396 = vadd.f32 %v90, %v395
  %v397 = vpop.f32.mrb[0].mxu0
  %v398 = vadd.f32 %v90, %v397
  %399 = vdwg.mxu0
  %400 = vmatprep.subr.mxu0 0.0
  %401 = vmatpush1.xpose.msra.mxu0 %v228
  %402 = vmatprep.subr.mxu0 0.0
  %403 = vmatpush1.xpose.msra.mxu0 %v231
  %404 = vmatprep.subr.mxu0 0.0
  %405 = vmatpush1.xpose.msra.mxu0 %v234
  %406 = vmatprep.subr.mxu0 0.0
  %407 = vmatpush1.xpose.msra.mxu0 %v237
  %408 = vmatprep.subr.mxu0 0.0
  %409 = vmatpush1.xpose.msra.mxu0 %v240
  %410 = vmatprep.subr.mxu0 0.0
  %411 = vmatpush1.xpose.msra.mxu0 %v243
  %412 = vmatprep.subr.mxu0 0.0
  %413 = vmatpush1.xpose.msra.mxu0 %v246
  %414 = vmatprep.subr.mxu0 0.0
  %415 = vmatpush1.xpose.msra.mxu0 %v249
  %416 = vmatprep.subr.mxu0 0.0
  %417 = vmatpush1.xpose.msra.mxu0 %v252
  %418 = vmatprep.subr.mxu0 0.0
  %419 = vmatpush1.xpose.msra.mxu0 %v255
  %420 = vmatprep.subr.mxu0 0.0
  %421 = vmatpush1.xpose.msra.mxu0 %v258
  %422 = vmatprep.subr.mxu0 0.0
  %423 = vmatpush1.xpose.msra.mxu0 %v261
  %424 = vmatprep.subr.mxu0 0.0
  %425 = vmatpush1.xpose.msra.mxu0 %v264
  %426 = vmatprep.subr.mxu0 0.0
  %427 = vmatpush1.xpose.msra.mxu0 %v267
  %428 = vmatprep.subr.mxu0 0.0
  %429 = vmatpush1.xpose.msra.mxu0 %v270
  %430 = vmatprep.subr.mxu0 0.0
  %431 = vmatpush1.xpose.msra.mxu0 %v273
  %432 = vmatprep.subr.mxu0 0.0
  %433 = vmatpush1.xpose.msra.mxu0 %v276
  %434 = vmatprep.subr.mxu0 0.0
  %435 = vmatpush1.xpose.msra.mxu0 %v279
  %436 = vmatprep.subr.mxu0 0.0
  %437 = vmatpush1.xpose.msra.mxu0 %v282
  %438 = vmatprep.subr.mxu0 0.0
  %439 = vmatpush1.xpose.msra.mxu0 %v285
  %440 = vmatprep.subr.mxu0 0.0
  %441 = vmatpush1.xpose.msra.mxu0 %v288
  %442 = vmatprep.subr.mxu0 0.0
  %443 = vmatpush1.xpose.msra.mxu0 %v291
  %444 = vmatprep.subr.mxu0 0.0
  %445 = vmatpush1.xpose.msra.mxu0 %v294
  %446 = vmatprep.subr.mxu0 0.0
  %447 = vmatpush1.xpose.msra.mxu0 %v297
  %448 = vmatprep.subr.mxu0 0.0
  %449 = vmatpush1.xpose.msra.mxu0 %v300
  %450 = vmatprep.subr.mxu0 0.0
  %451 = vmatpush1.xpose.msra.mxu0 %v303
  %452 = vmatprep.subr.mxu0 0.0
  %453 = vmatpush1.xpose.msra.mxu0 %v306
  %454 = vmatprep.subr.mxu0 0.0
  %455 = vmatpush1.xpose.msra.mxu0 %v309
  %456 = vmatprep.subr.mxu0 0.0
  %457 = vmatpush1.xpose.msra.mxu0 %v312
  %458 = vmatprep.subr.mxu0 0.0
  %459 = vmatpush1.xpose.msra.mxu0 %v315
  %460 = vmatprep.subr.mxu0 0.0
  %461 = vmatpush1.xpose.msra.mxu0 %v318
  %462 = vmatprep.subr.mxu0 0.0
  %463 = vmatpush1.xpose.msra.mxu0 %v321
  %464 = vmatprep.mubr.f32.mxu0 0.0
  %465 = vmatmul.mubr.f32.gmra.mrb[0].mxu0 %v126
  %v466 = vpop.f32.mrb[0].mxu0
  %v467 = vadd.f32 %v85, %v466
  %v468 = vpop.f32.mrb[0].mxu0
  %v469 = vadd.f32 %v85, %v468
  %470 = vmatprep.mubr.f32.mxu0 0.0
  %471 = vmatmul.mubr.f32.gmra.mrb[0].mxu0 %v129
  %v472 = vpop.f32.mrb[0].mxu0
  %v473 = vadd.f32 %v90, %v472
  %v474 = vpop.f32.mrb[0].mxu0
  %v475 = vadd.f32 %v90, %v474
  %476 = vdwg.mxu0
  %v477 = vxor.u32 %v390, 2147483648
  %v478 = vxor.u32 %v392, 2147483648
  %v479 = vxor.u32 %v467, 2147483648
  %v480 = vxor.u32 %v469, 2147483648
  %v481 = vxor.u32 %v396, 2147483648
  %v482 = vxor.u32 %v398, 2147483648
  %v483 = vxor.u32 %v473, 2147483648
  %v484 = vxor.u32 %v475, 2147483648
  %v485 = vmul.f32 %v477, 1.442695
  %v486 = vpow.pop %v485
  %v487 = vmul.f32 %v478, 1.442695
  %v488 = vpow.pop %v487
  %v489 = vmul.f32 %v479, 1.442695
  %v490 = vpow.pop %v489
  %v491 = vmul.f32 %v480, 1.442695
  %v492 = vpow.pop %v491
  %v493 = vmul.f32 %v481, 1.442695
  %v494 = vpow.pop %v493
  %v495 = vmul.f32 %v482, 1.442695
  %v496 = vpow.pop %v495
  %v497 = vmul.f32 %v483, 1.442695
  %v498 = vpow.pop %v497
  %v499 = vmul.f32 %v484, 1.442695
  %v500 = vpow.pop %v499
  %v501 = vadd.f32 %v486, 1.0
  %v502 = vadd.f32 %v488, 1.0
  %v503 = vadd.f32 %v490, 1.0
  %v504 = vadd.f32 %v492, 1.0
  %v505 = vadd.f32 %v494, 1.0
  %v506 = vadd.f32 %v496, 1.0
  %v507 = vadd.f32 %v498, 1.0
  %v508 = vadd.f32 %v500, 1.0
  %v509 = vrcp.pop %v501
  %v510 = vmul.f32 1.0, %v509
  %v511 = vrcp.pop %v502
  %v512 = vmul.f32 1.0, %v511
  %v513 = vrcp.pop %v503
  %v514 = vmul.f32 1.0, %v513
  %v515 = vrcp.pop %v504
  %v516 = vmul.f32 1.0, %v515
  %v517 = vrcp.pop %v505
  %v518 = vmul.f32 1.0, %v517
  %v519 = vrcp.pop %v506
  %v520 = vmul.f32 1.0, %v519
  %v521 = vrcp.pop %v507
  %v522 = vmul.f32 1.0, %v521
  %v523 = vrcp.pop %v508
  %v524 = vmul.f32 1.0, %v523
  %525 = vst [vmem:[%s3] sm:$0xff] %v510
  %526 = vst [vmem:[%s3 + $0x8] sm:$0xff] %v512
  %527 = vst [vmem:[%s3 + $0x10] sm:$0xff] %v514
  %528 = vst [vmem:[%s3 + $0x18] sm:$0xff] %v516
  %529 = vst [vmem:[%s3 + $0x20] sm:$0xf] %v518
  %530 = vst [vmem:[%s3 + $0x28] sm:$0xf] %v520
  %531 = vst [vmem:[%s3 + $0x30] sm:$0xf] %v522
  %532 = vst [vmem:[%s3 + $0x38] sm:$0xf] %v524
  // Predicated region
  $region14: #{deconv2net_forward.3} parent=0 // pred_check
    _
  $region15: #{deconv2net_forward.3} parent=0 // pred_check_branch
    %534 = sbr.rel (0) target = $region17
  $region16: #{deconv2net_forward.3} parent=0 // pred_region
    _
  $region17: #{deconv2net_forward.3} parent=0 // pred_fallthru
    _
  // Predicated region
  $region18: #{deconv2net_forward.3} parent=0 // pred_check
    _
  $region19: #{deconv2net_forward.3} parent=0 // pred_check_branch
    %536 = sbr.rel (0) target = $region21
  $region20: #{deconv2net_forward.3} parent=0 // pred_region
    _
  $region21: #{deconv2net_forward.3} parent=0 // pred_fallthru
    _

</llo_original>
